<compile_context>
chip_gen: v5e
topology: v5e:2x2
jax: 0.10.0
libtpu: 0.0.40
codegen_flags: <defaults>
</compile_context>

<pallas_src>
import jax
import jax.numpy as jnp
from jax import lax
from jax.experimental import pallas as pl
from jax.experimental.pallas import tpu as pltpu


LANE = 128                       # TPU lane width.
_VMEM_BUDGET = 12 * 1024 * 1024  # stay well under v5e's 16 MiB default scoped VMEM.


def _round_up(x: int, m: int) -> int:
    return ((x + m - 1) // m) * m


def _cdiv(a: int, b: int) -> int:
    return -(-a // b)


# --------------------------------------------------------------------------
# Pallas kernel: fused MLP forward (one batch tile per grid step)
# --------------------------------------------------------------------------
def _make_mlp_kernel(num_hidden: int):
    """Fused MLP kernel: `num_hidden` hidden layers (ReLU) + 1-wide output head.

    Ref layout (wrest omitted when num_hidden == 1):
      x_ref     : (b_tile, state_dim)      f32   raw state tile
      w0_ref    : (state_dim, P)           bf16  first hidden layer weight
      wrest_ref : (num_hidden-1, P, P)     bf16  remaining hidden weights
      b_ref     : (num_hidden, 1, P)       f32   hidden biases
      wlast_ref : (1, P)                   f32   output-head weight (row)
      blast_ref : (1, 1)                   f32   output-head bias (SMEM)
      out_ref   : (1, b_tile)              f32   lane-dense value row
    """
    num_rest = num_hidden - 1

    def kernel(*refs):
        if num_rest > 0:
            x_ref, w0_ref, wrest_ref, b_ref, wlast_ref, blast_ref, out_ref = refs
        else:
            x_ref, w0_ref, b_ref, wlast_ref, blast_ref, out_ref = refs
            wrest_ref = None

        # Layer 0: cast the raw f32 state to bf16 in-register and run a
        # small-K MXU matmul against the un-padded-K first-layer weight.
        h = jnp.dot(x_ref[...].astype(jnp.bfloat16), w0_ref[...],
                    preferred_element_type=jnp.float32)
        h = jnp.maximum(h + b_ref[0], 0.0)                     # VPU, f32
        # TODO(synk): activation is assumed to be nn.ReLU (common IQL config);
        # other activations need this jnp.maximum (and the zero-padding
        # exactness argument) revisited.

        # Remaining hidden layers: static unroll so the scheduler sees the
        # whole matmul / bias / ReLU dependency chain.
        for i in range(num_rest):
            z = jnp.dot(h.astype(jnp.bfloat16), wrest_ref[i],   # MXU bf16->f32
                        preferred_element_type=jnp.float32)
            h = jnp.maximum(z + b_ref[i + 1], 0.0)

        # Output head Linear(P -> 1): compute wlast @ h^T so the result lands
        # directly as a lane-dense (1, b_tile) row (dense stores / writeback
        # instead of width-1 masked vst).  f32 operands preserve head precision.
        v = lax.dot_general(wlast_ref[...], h,
                            dimension_numbers=(((1,), (1,)), ((), ())),
                            preferred_element_type=jnp.float32)
        out_ref[...] = v + blast_ref[0, 0]

    return kernel


# --------------------------------------------------------------------------
# Batch-tiling plan
# --------------------------------------------------------------------------
def _plan_batch_tiling(batch, max_b_tile, per_row_vmem, fixed_vmem,
                       vmem_budget=_VMEM_BUDGET):
    """Pick (b_tile, num_tiles) for the 1-D batch grid.

    Invariants (keep the lane-dense (1, b_tile) output block legal and the MXU
    M dim full): b_tile is a multiple of 16 and equals the whole padded batch
    when num_tiles == 1; it is a multiple of 128 when num_tiles > 1.
    """
    batch16 = _round_up(batch, 16)            # bf16 sublane pack granularity
    # Gate the tile size on the VMEM budget (big tiles amortize the ~0.35 us
    # fixed per-grid-step pipeline overhead).
    vmem_rows = max(128, (vmem_budget - fixed_vmem) // per_row_vmem)
    max_b_tile = max(128, min(max_b_tile, vmem_rows))

    if batch16 <= max_b_tile and batch16 < 512:
        # Small batch: a single tile (output block == full array); not worth
        # splitting across TensorCores.
        return batch16, 1

    # >= 2 balanced tiles so the "parallel" batch axis can land on both v7x
    # TensorCores (harmless single-TC on v5e/v6e).
    num_tiles = max(2, _cdiv(batch16, max_b_tile))
    b_tile = min(_round_up(_cdiv(batch16, num_tiles), 128),
                 _round_up(max_b_tile, 128))
    num_tiles = max(2, _cdiv(batch16, b_tile))
    return b_tile, num_tiles


# --------------------------------------------------------------------------
# Wrapper: pack parameters and launch the kernel over the batch grid
# --------------------------------------------------------------------------
def value_net_forward(state, params, *, max_b_tile: int = 2048):
    """Fused Pallas forward for ValueNet.

    Args:
      state:  (batch, state_dim) float32.
      params: list of (W, b) with W: (in, out) float32, b: (1, out) float32.
              Last layer must have out == 1.
    Returns:
      (batch, 1) float32 value estimates.
    """
    assert len(params) >= 2, "expect at least one hidden layer + output layer"
    num_hidden = len(params) - 1
    num_rest = num_hidden - 1
    batch, state_dim = state.shape
    assert params[-1][0].shape[1] == 1, "ValueNet output dim must be 1"

    # One lane-dense padded width shared by every hidden layer.
    # TODO(synk): if hidden widths differ a lot (e.g. [1024, 256]) pack per
    # distinct width instead of padding every layer to the max.
    P = _round_up(max(params[i][0].shape[1] for i in range(num_hidden)), LANE)

    # Resident (double-buffered by default) VMEM footprint of the weights.
    fixed_vmem = 2 * (state_dim * P * 2          # w0   bf16
                      + num_rest * P * P * 2     # wrest bf16
                      + num_hidden * P * 4       # biases f32
                      + P * 4)                   # wlast f32
    # Weight stacks must comfortably fit; otherwise switch the constant-index
    # weight specs to pl.Buffered(1) / per-width packing (matters on v7x 64MiB).
    assert fixed_vmem <= _VMEM_BUDGET // 2, (
        f"resident weight stack ({fixed_vmem} B) too large; use pl.Buffered(1) "
        "on the weight BlockSpecs or pack per-layer widths")

    # Per-batch-row streamed VMEM: x (f32, x2 buffers) + out (f32, x2) + a few
    # live activation copies inside the body.
    per_row_vmem = 2 * state_dim * 4 + 2 * 4 + 3 * P * 4

    b_tile, num_tiles = _plan_batch_tiling(batch, max_b_tile,
                                           per_row_vmem, fixed_vmem)
    padded_batch = b_tile * num_tiles

    # Only row-pad the raw f32 state when needed (no column pad, no bf16 cast
    # in HBM — the cast happens in-register inside the kernel).
    x = state if padded_batch == batch else jnp.pad(
        state, ((0, padded_batch - batch), (0, 0)))

    # ---- pack parameters (layout-only; in a training/inference loop do this
    # once outside and reuse) -----------------------------------------------
    w0 = jnp.pad(params[0][0], ((0, 0), (0, P - params[0][0].shape[1])))
    w0 = w0.astype(jnp.bfloat16)                                   # (state_dim, P)
    b_stack = jnp.stack([
        jnp.pad(params[i][1], ((0, 0), (0, P - params[i][1].shape[1])))
        for i in range(num_hidden)]).astype(jnp.float32)           # (L, 1, P)
    if num_rest > 0:
        w_rest = jnp.stack([
            jnp.pad(params[i][0], ((0, P - params[i][0].shape[0]),
                                   (0, P - params[i][0].shape[1])))
            for i in range(1, num_hidden)]).astype(jnp.bfloat16)   # (L-1, P, P)
    w_last, b_last = params[-1]
    wlast_row = jnp.pad(w_last[:, 0], (0, P - w_last.shape[0]))
    wlast_row = wlast_row.reshape(1, P).astype(jnp.float32)        # (1, P)
    blast = jnp.asarray(b_last, jnp.float32).reshape(1, 1)         # (1, 1) SMEM

    # ---- specs --------------------------------------------------------------
    in_specs = [
        # Raw f32 state: tiled over the batch grid (auto double-buffered DMA).
        pl.BlockSpec((b_tile, state_dim), lambda i: (i, 0)),
        # Constant index_maps: weights fetched once, VMEM-resident across steps.
        pl.BlockSpec((state_dim, P), lambda i: (0, 0)),
    ]
    operands = [x, w0]
    if num_rest > 0:
        in_specs.append(pl.BlockSpec((num_rest, P, P), lambda i: (0, 0, 0)))
        operands.append(w_rest)
    in_specs += [
        pl.BlockSpec((num_hidden, 1, P), lambda i: (0, 0, 0)),
        pl.BlockSpec((1, P), lambda i: (0, 0)),
        # Output-head bias: scalar resident in SMEM.
        pl.BlockSpec(memory_space=pltpu.MemorySpace.SMEM),
    ]
    operands += [b_stack, wlast_row, blast]

    out = pl.pallas_call(
        _make_mlp_kernel(num_hidden),
        out_shape=jax.ShapeDtypeStruct((1, padded_batch), jnp.float32),
        grid=(num_tiles,),
        in_specs=in_specs,
        # Lane-dense output: each grid step writes a (1, b_tile) row segment.
        out_specs=pl.BlockSpec((1, b_tile), lambda i: (0, i)),
        compiler_params=pltpu.CompilerParams(
            # Batch axis is embarrassingly parallel -> shards across both
            # TensorCores on v7x; harmless on v5e/v6e.
            dimension_semantics=("parallel",),
        ),
    )(*operands)

    return out[0, :batch].reshape(batch, 1)


# --------------------------------------------------------------------------
# Deterministic parameter init (PyTorch nn.Linear default: U(-1/sqrt(in), 1/sqrt(in)))
# --------------------------------------------------------------------------
def init_value_net_params(key, state_dim, hidden_sizes):
    sizes = [state_dim] + list(hidden_sizes) + [1]
    params = []
    for i in range(len(sizes) - 1):
        fan_in, fan_out = sizes[i], sizes[i + 1]
        key, kw, kb = jax.random.split(key, 3)
        bound = 1.0 / jnp.sqrt(jnp.float32(fan_in))
        w = jax.random.uniform(kw, (fan_in, fan_out), jnp.float32, -bound, bound)
        b = jax.random.uniform(kb, (1, fan_out), jnp.float32, -bound, bound)
        params.append((w, b))
    return params


# --------------------------------------------------------------------------
# Pure-JAX f32 reference (matches the PyTorch module semantics exactly)
# --------------------------------------------------------------------------
def value_net_ref(state, params):
    h = state
    for i, (w, b) in enumerate(params):
        h = h @ w + b
        if i < len(params) - 1:
            h = jnp.maximum(h, 0.0)
    return h


if __name__ == "__main__":
    key = jax.random.PRNGKey(0)

    # Small shapes consistent with the module: batch=8 states of dim 16,
    # hidden_sizes=[32, 32], activation=ReLU.
    batch, state_dim, hidden_sizes = 8, 16, [32, 32]

    key, k_params, k_state = jax.random.split(key, 3)
    params = init_value_net_params(k_params, state_dim, hidden_sizes)
    state = jax.random.normal(k_state, (batch, state_dim), jnp.float32)

    out = jax.block_until_ready(value_net_forward(state, params))
    ref = value_net_ref(state, params)
    assert out.shape == (batch, 1), out.shape
    # Hidden matmuls use bf16 operands with f32 accumulation -> loosened tol.
    assert jnp.allclose(out, ref, atol=5e-2, rtol=5e-2), (out, ref)

    # Also exercise the multi-tile (megacore) path with a ragged batch.
    state2 = jax.random.normal(jax.random.fold_in(k_state, 1),
                               (600, state_dim), jnp.float32)
    out2 = jax.block_until_ready(value_net_forward(state2, params))
    ref2 = value_net_ref(state2, params)
    assert out2.shape == (600, 1), out2.shape
    assert jnp.allclose(out2, ref2, atol=5e-2, rtol=5e-2)

    print("KERNEL_OK")
</pallas_src>

<mosaic_0001>
module attributes {stable_mosaic.version = 11 : i64} {
  func.func @kernel(%arg0: i32, %arg1: memref<16x16xf32, #tpu.memory_space<vmem>>, %arg2: memref<16x128xbf16, #tpu.memory_space<vmem>>, %arg3: memref<1x128x128xbf16, #tpu.memory_space<vmem>>, %arg4: memref<2x1x128xf32, #tpu.memory_space<vmem>>, %arg5: memref<1x128xf32, #tpu.memory_space<vmem>>, %arg6: memref<1x1xf32, #tpu.memory_space<smem>>, %arg7: memref<1x16xf32, #tpu.memory_space<vmem>>) attributes {dimension_semantics = [#tpu.dimension_semantics<parallel>], iteration_bounds = array<i64: 1>, scalar_prefetch = 0 : i64, scratch_operands = 0 : i64, tpu.core_type = #tpu.core_type<tc>, window_params = [{transform_indices = @transform_0, window_bounds = array<i64: 16, 16>}, {pipeline_mode = #tpu.pipeline_mode<synchronous>, transform_indices = @transform_1, window_bounds = array<i64: 16, 128>}, {pipeline_mode = #tpu.pipeline_mode<synchronous>, transform_indices = @transform_2, window_bounds = array<i64: 1, 128, 128>}, {pipeline_mode = #tpu.pipeline_mode<synchronous>, transform_indices = @transform_3, window_bounds = array<i64: 2, 1, 128>}, {pipeline_mode = #tpu.pipeline_mode<synchronous>, transform_indices = @transform_4, window_bounds = array<i64: 1, 128>}, {transform_indices = @transform_5, window_bounds = array<i64: 1, 1>}, {transform_indices = @transform_6, window_bounds = array<i64: 1, 16>}]} {
    %c0 = arith.constant 0 : index
    %c0_0 = arith.constant 0 : index
    %0 = vector.load %arg1[%c0, %c0_0] : memref<16x16xf32, #tpu.memory_space<vmem>>, vector<16x16xf32>
    %1 = arith.truncf %0 : vector<16x16xf32> to vector<16x16xbf16>
    %c0_1 = arith.constant 0 : index
    %c0_2 = arith.constant 0 : index
    %2 = vector.load %arg2[%c0_1, %c0_2] : memref<16x128xbf16, #tpu.memory_space<vmem>>, vector<16x128xbf16>
    %cst = arith.constant dense<0.000000e+00> : vector<16x128xf32>
    %3 = tpu.matmul %1, %2, %cst {dimension_numbers = #tpu.dot_dimension_numbers<[1], [0], [0], [1], [0, 0, 1, 1], [], []>} : vector<16x16xbf16>, vector<16x128xbf16>, vector<16x128xf32> -> vector<16x128xf32>
    %c0_3 = arith.constant 0 : index
    %c0_4 = arith.constant 0 : index
    %c0_5 = arith.constant 0 : index
    %4 = vector.load %arg4[%c0_3, %c0_4, %c0_5] : memref<2x1x128xf32, #tpu.memory_space<vmem>>, vector<1x1x128xf32>
    %5 = vector.shape_cast %4 : vector<1x1x128xf32> to vector<1x128xf32>
    %6 = vector.broadcast %5 : vector<1x128xf32> to vector<16x128xf32>
    %7 = arith.addf %3, %6 : vector<16x128xf32>
    %cst_6 = arith.constant 0.000000e+00 : f32
    %8 = vector.broadcast %cst_6 : f32 to vector<16x128xf32>
    %9 = arith.maximumf %7, %8 : vector<16x128xf32>
    %10 = arith.truncf %9 : vector<16x128xf32> to vector<16x128xbf16>
    %c0_7 = arith.constant 0 : index
    %c0_8 = arith.constant 0 : index
    %c0_9 = arith.constant 0 : index
    %11 = vector.load %arg3[%c0_7, %c0_8, %c0_9] : memref<1x128x128xbf16, #tpu.memory_space<vmem>>, vector<1x128x128xbf16>
    %12 = vector.shape_cast %11 : vector<1x128x128xbf16> to vector<128x128xbf16>
    %cst_10 = arith.constant dense<0.000000e+00> : vector<16x128xf32>
    %13 = tpu.matmul %10, %12, %cst_10 {dimension_numbers = #tpu.dot_dimension_numbers<[1], [0], [0], [1], [0, 0, 1, 1], [], []>} : vector<16x128xbf16>, vector<128x128xbf16>, vector<16x128xf32> -> vector<16x128xf32>
    %c1 = arith.constant 1 : index
    %c0_11 = arith.constant 0 : index
    %c0_12 = arith.constant 0 : index
    %14 = vector.load %arg4[%c1, %c0_11, %c0_12] : memref<2x1x128xf32, #tpu.memory_space<vmem>>, vector<1x1x128xf32>
    %15 = vector.shape_cast %14 : vector<1x1x128xf32> to vector<1x128xf32>
    %16 = vector.broadcast %15 : vector<1x128xf32> to vector<16x128xf32>
    %17 = arith.addf %13, %16 : vector<16x128xf32>
    %cst_13 = arith.constant 0.000000e+00 : f32
    %18 = vector.broadcast %cst_13 : f32 to vector<16x128xf32>
    %19 = arith.maximumf %17, %18 : vector<16x128xf32>
    %c0_14 = arith.constant 0 : index
    %c0_15 = arith.constant 0 : index
    %20 = vector.load %arg5[%c0_14, %c0_15] : memref<1x128xf32, #tpu.memory_space<vmem>>, vector<1x128xf32>
    %cst_16 = arith.constant dense<0.000000e+00> : vector<1x16xf32>
    %21 = tpu.matmul %20, %19, %cst_16 {dimension_numbers = #tpu.dot_dimension_numbers<[1], [1], [0], [0], [0, 0, 1, 0], [], []>} : vector<1x128xf32>, vector<16x128xf32>, vector<1x16xf32> -> vector<1x16xf32>
    %c0_17 = arith.constant 0 : index
    %c0_18 = arith.constant 0 : index
    %22 = memref.load %arg6[%c0_17, %c0_18] : memref<1x1xf32, #tpu.memory_space<smem>>
    %23 = vector.broadcast %22 : f32 to vector<1x16xf32>
    %24 = arith.addf %21, %23 : vector<1x16xf32>
    %c0_19 = arith.constant 0 : index
    %c0_20 = arith.constant 0 : index
    %25 = vector.load %arg7[%c0_19, %c0_20] : memref<1x16xf32, #tpu.memory_space<vmem>>, vector<1x16xf32>
    tpu.vector_store %arg7[%c0_19, %c0_20], %24 {strides = array<i32>} : memref<1x16xf32, #tpu.memory_space<vmem>>, vector<1x16xf32>,
    return
  }
  func.func @transform_0(%arg0: i32) -> (i32, i32) {
    %c0_i32 = arith.constant 0 : i32
    %c0_i32_0 = arith.constant 0 : i32
    return %arg0, %c0_i32 : i32, i32
  }
  func.func @transform_1(%arg0: i32) -> (i32, i32) {
    %c0_i32 = arith.constant 0 : i32
    %c0_i32_0 = arith.constant 0 : i32
    %c0_i32_1 = arith.constant 0 : i32
    return %c0_i32, %c0_i32_0 : i32, i32
  }
  func.func @transform_2(%arg0: i32) -> (i32, i32, i32) {
    %c0_i32 = arith.constant 0 : i32
    %c0_i32_0 = arith.constant 0 : i32
    %c0_i32_1 = arith.constant 0 : i32
    %c0_i32_2 = arith.constant 0 : i32
    return %c0_i32, %c0_i32_0, %c0_i32_1 : i32, i32, i32
  }
  func.func @transform_3(%arg0: i32) -> (i32, i32, i32) {
    %c0_i32 = arith.constant 0 : i32
    %c0_i32_0 = arith.constant 0 : i32
    %c0_i32_1 = arith.constant 0 : i32
    %c0_i32_2 = arith.constant 0 : i32
    return %c0_i32, %c0_i32_0, %c0_i32_1 : i32, i32, i32
  }
  func.func @transform_4(%arg0: i32) -> (i32, i32) {
    %c0_i32 = arith.constant 0 : i32
    %c0_i32_0 = arith.constant 0 : i32
    %c0_i32_1 = arith.constant 0 : i32
    return %c0_i32, %c0_i32_0 : i32, i32
  }
  func.func @transform_5(%arg0: i32) -> (i32, i32) {
    %c0_i32 = arith.constant 0 : i32
    %c0_i32_0 = arith.constant 0 : i32
    %c0_i32_1 = arith.constant 0 : i32
    return %c0_i32, %c0_i32_0 : i32, i32
  }
  func.func @transform_6(%arg0: i32) -> (i32, i32) {
    %c0_i32 = arith.constant 0 : i32
    %c0_i32_0 = arith.constant 0 : i32
    return %c0_i32, %arg0 : i32, i32
  }
}

</mosaic_0001>

<llo_original>
// kernel: tpu_custom_call.1
$region0: #{tpu_custom_call.1}
  #allocation0 [shape = 'u32[]', space=smem, size = 0x4, offset = 0x4, fixed_abs, tag = 'smem constant byte address 0x4 - core index']
  #allocation1 [shape = 'u32[72,128]{1,0:T(1,128)}', space=vmem, size = 0x9000, scoped, tag = 'internal scratch']
  #allocation2 [shape = 'f32[1,1]{1,0:T(1,128)S(6)}', space=smem, size = 0x200, scoped, tag = 'scoped memory for tpu_custom_call.1']
  %s0 = inlined_call_operand.hbm [shape: f32[16,16], index: 0, kind: input, shape index: {}]
  %s1 = inlined_call_operand.hbm [shape: bf16[16,128], index: 1, kind: input, shape index: {}]
  %s2 = inlined_call_operand.hbm [shape: bf16[1,128,128], index: 2, kind: input, shape index: {}]
  %s3 = inlined_call_operand.vmem [shape: f32[2,1,128], index: 3, kind: input, shape index: {}]
  %s4 = inlined_call_operand.vmem [shape: f32[1,128], index: 4, kind: input, shape index: {}]
  %s5 = inlined_call_operand.<no memory space> [shape: f32[1,1], index: 5, kind: input, shape index: {}]
  %s6 = inlined_call_operand.hbm [shape: f32[1,16], index: 6, kind: output, shape index: {}]
  %s7 = sld [smem:[#allocation0]]
  $region46: #{tpu_custom_call.1} parent=0
    _
  %s9 = ssub.s32 1, %s7
  %s10 = scalar_select 0, %s9, %s7
  %11 = sst [smem:[#allocation2]] %s5
  $region1: #{tpu_custom_call.1} parent=0
    #allocation3 [shape = 'u8[8192]{0}', space=vmem, size = 0x2000, scoped, tag = 'input window, operand 0, single buffered']
    #allocation4 [shape = 's32[1]{0}', space=sflag, size = 0x4, scoped, tag = 'scoped memory for tpu_custom_call.1']
    #allocation5 [shape = 's32[1]{0}', space=sflag, size = 0x4, scoped, tag = 'scoped memory for tpu_custom_call.1']
    #allocation6 [shape = 'u8[4096]{0}', space=vmem, size = 0x1000, scoped, tag = 'input window, operand 1, single buffered']
    #allocation7 [shape = 's32[1]{0}', space=sflag, size = 0x4, scoped, tag = 'scoped memory for tpu_custom_call.1']
    #allocation8 [shape = 'u8[32768]{0}', space=vmem, size = 0x8000, scoped, tag = 'input window, operand 2, single buffered']
    #allocation9 [shape = 'u8[512]{0}', space=vmem, size = 0x400, scoped, tag = 'output window, operand 0, single buffered']
    %12 = vsyncpa [#allocation4], 0
    %13 = vsyncpa [#allocation7], 0
    %14 = vsyncpa [#allocation5], 0
    // Predicated region
    $region2: #{tpu_custom_call.1} parent=1 // pred_check
      _
    $region3: #{tpu_custom_call.1} parent=1 // pred_check_branch
      %16 = sbr.rel (0) target = $region5
    $region4: #{tpu_custom_call.1} parent=1 // pred_region
      %18 = vsyncadd [#allocation4], 0
      %s19 = sshll.u32 %s0, 4
      %s20 = int_to_ptr.hbm [resolvable:$true] %s19
      %s21 = sshll.u32 [#allocation3], 4
      %s22 = int_to_ptr.vmem [resolvable:$true] %s21
      %27 = dma.hbm_to_vmem [thread:$0]  %s20, 256, %s22, [#allocation4], 128, 128, 8
    $region5: #{tpu_custom_call.1} parent=1 // pred_fallthru
      _
    // Predicated region
    $region6: #{tpu_custom_call.1} parent=1 // pred_check
      _
    $region7: #{tpu_custom_call.1} parent=1 // pred_check_branch
      %29 = sbr.rel (0) target = $region9
    $region8: #{tpu_custom_call.1} parent=1 // pred_region
      %31 = vsyncadd [#allocation7], 0
      %s32 = sshll.u32 %s1, 4
      %s33 = int_to_ptr.hbm [resolvable:$true] %s32
      %s34 = sshll.u32 [#allocation6], 4
      %s35 = int_to_ptr.vmem [resolvable:$true] %s34
      %40 = dma.hbm_to_vmem [thread:$0]  %s33, 128, %s35, [#allocation7], 64, 64, 4
    $region9: #{tpu_custom_call.1} parent=1 // pred_fallthru
      _
    // Predicated region
    $region10: #{tpu_custom_call.1} parent=1 // pred_check
      _
    $region11: #{tpu_custom_call.1} parent=1 // pred_check_branch
      %42 = sbr.rel (0) target = $region13
    $region12: #{tpu_custom_call.1} parent=1 // pred_region
      %44 = vsyncadd [#allocation7], 0
      %s45 = sshll.u32 %s2, 4
      %s46 = int_to_ptr.hbm [resolvable:$true] %s45
      %s47 = sshll.u32 [#allocation8], 4
      %s48 = int_to_ptr.vmem [resolvable:$true] %s47
      %53 = dma.hbm_to_vmem [thread:$0]  %s46, 1024, %s48, [#allocation7], 64, 64, 4
    $region13: #{tpu_custom_call.1} parent=1 // pred_fallthru
      _
    // Predicated region
    $region14: #{tpu_custom_call.1} parent=1 // pred_check
      _
    $region15: #{tpu_custom_call.1} parent=1 // pred_check_branch
      %55 = sbr.rel (0) target = $region17
    $region16: #{tpu_custom_call.1} parent=1 // pred_region
      _
    $region17: #{tpu_custom_call.1} parent=1 // pred_fallthru
      _
    // Predicated region
    $region18: #{tpu_custom_call.1} parent=1 // pred_check
      _
    $region19: #{tpu_custom_call.1} parent=1 // pred_check_branch
      %57 = sbr.rel (0) target = $region21
    $region20: #{tpu_custom_call.1} parent=1 // pred_region
      _
    $region21: #{tpu_custom_call.1} parent=1 // pred_fallthru
      _
    // Predicated region
    $region22: #{tpu_custom_call.1} parent=1 // pred_check
      _
    $region23: #{tpu_custom_call.1} parent=1 // pred_check_branch
      %59 = sbr.rel (0) target = $region25
    $region24: #{tpu_custom_call.1} parent=1 // pred_region
      _
    $region25: #{tpu_custom_call.1} parent=1 // pred_fallthru
      _
    // Predicated region
    $region26: #{tpu_custom_call.1} parent=1 // pred_check
      _
    $region27: #{tpu_custom_call.1} parent=1 // pred_check_branch
      %61 = sbr.rel (0) target = $region29
    $region28: #{tpu_custom_call.1} parent=1 // pred_region
      %63 = dma.done [#allocation4], 256
    $region29: #{tpu_custom_call.1} parent=1 // pred_fallthru
      _
    // Predicated region
    $region30: #{tpu_custom_call.1} parent=1 // pred_check
      _
    $region31: #{tpu_custom_call.1} parent=1 // pred_check_branch
      %65 = sbr.rel (0) target = $region33
    $region32: #{tpu_custom_call.1} parent=1 // pred_region
      %67 = dma.done [#allocation7], 128
    $region33: #{tpu_custom_call.1} parent=1 // pred_fallthru
      _
    // Predicated region
    $region34: #{tpu_custom_call.1} parent=1 // pred_check
      _
    $region35: #{tpu_custom_call.1} parent=1 // pred_check_branch
      %69 = sbr.rel (0) target = $region37
    $region36: #{tpu_custom_call.1} parent=1 // pred_region
      %71 = dma.done [#allocation7], 1024
    $region37: #{tpu_custom_call.1} parent=1 // pred_fallthru
      _
    %v73 = vld [vmem:[#allocation3] sm:$0xff]
    %v74 = vld [vmem:[#allocation3 + $0x8] sm:$0xff]
    %v75 = vpack.c.bf16 %v74, %v73
    %v76 = vld [vmem:[#allocation6] sm:$0xf]
    %v77 = vld [vmem:[#allocation6 + $0x4] sm:$0xf]
    %v78 = vld [vmem:[%s3] sm:$0x1]
    %v80 = vperm.slane %v78, 0
    %v84 = vunpack.c.l.b16 %v76
    %v85 = vunpack.c.l.b16 %v77
    %v86 = vpack.c.b16 %v85, %v84
    %vm88 = vcmask 130048
    %v90 = vsel %vm88, %v75, 0
    %92 = vmatpush.bf16.msra.mxu0 0
    %93 = vmatpush.bf16.msra.mxu0 0
    %94 = vmatpush.bf16.msra.mxu0 0
    %95 = vmatpush.bf16.msra.mxu0 0
    %96 = vmatpush.bf16.msra.mxu0 0
    %97 = vmatpush.bf16.msra.mxu0 0
    %98 = vmatpush.bf16.msra.mxu0 0
    %99 = vmatpush.bf16.msra.mxu0 %v86
    %100 = vmatmul.bf16.gmra.mxu0 %v90
    %v101 = vpop.f32.mrf.mxu0
    %v102 = vadd.f32 %v80, %v101
    %v103 = vpop.f32.mrf.mxu0
    %v104 = vadd.f32 %v80, %v103
    %105 = vdwg.mxu0
    %v106 = vmax.f32 %v102, 0.0
    %v107 = vmax.f32 %v104, 0.0
    %v108 = vpack.c.bf16 %v107, %v106
    %v109 = vld [vmem:[#allocation8] sm:$0xf]
    %v110 = vld [vmem:[#allocation8 + $0x4] sm:$0xf]
    %v111 = vld [vmem:[#allocation8 + $0x8] sm:$0xf]
    %v112 = vld [vmem:[#allocation8 + $0xc] sm:$0xf]
    %v113 = vld [vmem:[#allocation8 + $0x10] sm:$0xf]
    %v114 = vld [vmem:[#allocation8 + $0x14] sm:$0xf]
    %v115 = vld [vmem:[#allocation8 + $0x18] sm:$0xf]
    %v116 = vld [vmem:[#allocation8 + $0x1c] sm:$0xf]
    %v117 = vld [vmem:[#allocation8 + $0x20] sm:$0xf]
    %v118 = vld [vmem:[#allocation8 + $0x24] sm:$0xf]
    %v119 = vld [vmem:[#allocation8 + $0x28] sm:$0xf]
    %v120 = vld [vmem:[#allocation8 + $0x2c] sm:$0xf]
    %v121 = vld [vmem:[#allocation8 + $0x30] sm:$0xf]
    %v122 = vld [vmem:[#allocation8 + $0x34] sm:$0xf]
    %v123 = vld [vmem:[#allocation8 + $0x38] sm:$0xf]
    %v124 = vld [vmem:[#allocation8 + $0x3c] sm:$0xf]
    %s125 = scalar_lea.vmem %s3, 1
    %v126 = vld [vmem:[%s125] sm:$0x1]
    %v128 = vperm.slane %v126, 0
    %v146 = vunpack.c.l.b16 %v109
    %v147 = vunpack.c.l.b16 %v110
    %v148 = vunpack.c.l.b16 %v111
    %v149 = vunpack.c.l.b16 %v112
    %v150 = vunpack.c.l.b16 %v113
    %v151 = vunpack.c.l.b16 %v114
    %v152 = vunpack.c.l.b16 %v115
    %v153 = vunpack.c.l.b16 %v116
    %v154 = vunpack.c.l.b16 %v117
    %v155 = vunpack.c.l.b16 %v118
    %v156 = vunpack.c.l.b16 %v119
    %v157 = vunpack.c.l.b16 %v120
    %v158 = vunpack.c.l.b16 %v121
    %v159 = vunpack.c.l.b16 %v122
    %v160 = vunpack.c.l.b16 %v123
    %v161 = vunpack.c.l.b16 %v124
    %v162 = vpack.c.b16 %v147, %v146
    %v163 = vpack.c.b16 %v149, %v148
    %v164 = vpack.c.b16 %v151, %v150
    %v165 = vpack.c.b16 %v153, %v152
    %v166 = vpack.c.b16 %v155, %v154
    %v167 = vpack.c.b16 %v157, %v156
    %v168 = vpack.c.b16 %v159, %v158
    %v169 = vpack.c.b16 %v161, %v160
    %178 = vmatpush.bf16.msra.mxu0 %v169
    %179 = vmatpush.bf16.msra.mxu0 %v168
    %180 = vmatpush.bf16.msra.mxu0 %v167
    %181 = vmatpush.bf16.msra.mxu0 %v166
    %182 = vmatpush.bf16.msra.mxu0 %v165
    %183 = vmatpush.bf16.msra.mxu0 %v164
    %184 = vmatpush.bf16.msra.mxu0 %v163
    %185 = vmatpush.bf16.msra.mxu0 %v162
    %186 = vmatmul.bf16.gmra.mxu0 %v108
    %v187 = vpop.f32.mrf.mxu0
    %v188 = vadd.f32 %v128, %v187
    %v189 = vpop.f32.mrf.mxu0
    %v190 = vadd.f32 %v128, %v189
    %191 = vdwg.mxu0
    %v192 = vmax.f32 %v188, 0.0
    %v193 = vmax.f32 %v190, 0.0
    %v194 = vld [vmem:[%s4] sm:$0x1]
    %s195 = sld [smem:[#allocation2]]
    %v196 = vstv %s195
    %197 = vmatpush.xpose.msra.mxu0 0.0
    %198 = vmatpush.xpose.msra.mxu0 0.0
    %199 = vmatpush.xpose.msra.mxu0 0.0
    %200 = vmatpush.xpose.msra.mxu0 0.0
    %201 = vmatpush.xpose.msra.mxu0 0.0
    %202 = vmatpush.xpose.msra.mxu0 0.0
    %203 = vmatpush.xpose.msra.mxu0 0.0
    %204 = vmatpush.xpose.msra.mxu0 0.0
    %205 = vmatpush.xpose.msra.mxu0 0.0
    %206 = vmatpush.xpose.msra.mxu0 0.0
    %207 = vmatpush.xpose.msra.mxu0 0.0
    %208 = vmatpush.xpose.msra.mxu0 0.0
    %209 = vmatpush.xpose.msra.mxu0 0.0
    %210 = vmatpush.xpose.msra.mxu0 0.0
    %211 = vmatpush.xpose.msra.mxu0 %v193
    %212 = vmatpush.xpose.msra.mxu0 %v192
    %213 = vmatmul.f32.gmra.mxu0 %v194
    %v214 = vpop.f32.mrf.mxu0
    %v215 = vadd.f32 %v196, %v214
    %216 = vdwg.mxu0
    %vm217 = vcmask 122880
    %218 = vst.msk [vmem:[#allocation9] sm:$0x1] %vm217, %v215
    // Predicated region
    $region38: #{tpu_custom_call.1} parent=1 // pred_check
      _
    $region39: #{tpu_custom_call.1} parent=1 // pred_check_branch
      %220 = sbr.rel (0) target = $region41
    $region40: #{tpu_custom_call.1} parent=1 // pred_region
      %222 = vsyncadd [#allocation5], 0
      %s224 = sshll.u32 [#allocation9], 4
      %s225 = int_to_ptr.vmem [resolvable:$true] %s224
      %s226 = sshll.u32 %s6, 4
      %s227 = int_to_ptr.hbm [resolvable:$true] %s226
      %229 = dma.vmem_to_hbm [thread:$0]  %s225, 16, %s227, [#allocation5]
    $region41: #{tpu_custom_call.1} parent=1 // pred_fallthru
      _
    // Predicated region
    $region42: #{tpu_custom_call.1} parent=1 // pred_check
      _
    $region43: #{tpu_custom_call.1} parent=1 // pred_check_branch
      %231 = sbr.rel (0) target = $region45
    $region44: #{tpu_custom_call.1} parent=1 // pred_region
      %233 = dma.done [#allocation5], 16
    $region45: #{tpu_custom_call.1} parent=1 // pred_fallthru
      _
    %234 = vsyncpa [#allocation4], 1
    %235 = vsyncpa [#allocation7], 1
    %236 = vsyncpa [#allocation5], 1

</llo_original>
